<compile_context>
chip_gen: v7x
topology: tpu7x:2x2x1
jax: 0.10.0
libtpu: 0.0.40
codegen_flags: <defaults>
</compile_context>

<pallas_src>
import functools

import jax
import jax.numpy as jnp
from jax.experimental import pallas as pl
from jax.experimental.pallas import tpu as pltpu


# ----------------------------------------------------------------------------
# Generation-aware VMEM budgeting
# ----------------------------------------------------------------------------
def _vmem_capacity_bytes():
    try:
        cap = int(pltpu.get_tpu_info().vmem_capacity_bytes)
        if cap > 0:
            return cap
    except Exception:
        pass
    return 128 * 1024 * 1024  # v5e/v6e physical VMEM; conservative default


def _pipeline_budget_bytes():
    # Total pipelined working set: 2x input block + 2x output/accumulator
    # block.  Keep it at ~40% of physical VMEM, capped at 48 MiB.
    cap = _vmem_capacity_bytes()
    return min((cap * 2) // 5, 48 * 1024 * 1024)


def _block_budget_bytes():
    return _pipeline_budget_bytes() // 4


def _vmem_limit_bytes():
    cap = _vmem_capacity_bytes()
    return min(_pipeline_budget_bytes() + (16 << 20), cap - (8 << 20))


_MAX_LANE_TILE = 8192  # lane-dense, multiple of 128


def _tiles_2d(rows, lanes, itemsize, block_budget, row_align=8):
    """Pick (row_tile, lane_tile) for an elementwise-tiled (rows, lanes) view.

    lane_tile is either the full lane extent or a 128-aligned chunk; row_tile
    is either the full row extent or a multiple of `row_align` sized so one
    block fits the per-block VMEM budget.  Partial edge blocks are fine (they
    are masked by Pallas for elementwise work and masked in-kernel for init).
    """
    lane_tile = lanes if lanes <= _MAX_LANE_TILE else _MAX_LANE_TILE
    max_rows = max(1, block_budget // max(1, lane_tile * itemsize))
    if rows <= max_rows:
        row_tile = rows
    else:
        row_tile = max(row_align, (max_rows // row_align) * row_align)
    return row_tile, lane_tile


# ----------------------------------------------------------------------------
# Kernel 1: data-dependent initialization (streaming per-channel stats)
#   grid = (C_blocks, N, HW_blocks); c axis "parallel", reductions "arbitrary"
#   x block: (c_tile, hw_tile); block-wide f32 accumulators in VMEM scratch
# ----------------------------------------------------------------------------
def _actnorm_init_kernel(x_ref, loc_ref, scale_ref,
                         sum_ref, sumsq_ref, shift_ref,
                         *, total_count, hw, hw_tile):
    n = pl.program_id(1)
    t = pl.program_id(2)
    is_first = jnp.logical_and(n == 0, t == 0)
    is_last = jnp.logical_and(n == pl.num_programs(1) - 1,
                              t == pl.num_programs(2) - 1)

    x = x_ref[...].astype(jnp.float32)                      # (c_tile, hw_tile)

    @pl.when(is_first)
    def _():
        sum_ref[...] = jnp.zeros_like(sum_ref)
        sumsq_ref[...] = jnp.zeros_like(sumsq_ref)
        # Per-channel shift (first spatial element of sample 0) makes the
        # single-pass variance robust to a large DC offset in activations.
        shift_ref[...] = x[:, 0:1]

    # Mask lanes past the true HW extent (handles non-divisible HW tiles and
    # any garbage in the edge block) before accumulating.  Pure VPU work.
    lane = jax.lax.broadcasted_iota(jnp.int32, x.shape, dimension=1)
    valid = (t * hw_tile + lane) < hw
    xm = jnp.where(valid, x - shift_ref[...], 0.0)
    sum_ref[...] += xm
    sumsq_ref[...] += xm * xm

    @pl.when(is_last)
    def _():
        # One-time cross-lane reduce of the block-wide accumulators.
        s = jnp.sum(sum_ref[...], axis=-1, keepdims=True)       # (c_tile, 1)
        ss = jnp.sum(sumsq_ref[...], axis=-1, keepdims=True)
        mean_shifted = s * (1.0 / total_count)
        denom = 1.0 / float(max(total_count - 1, 1))            # ddof=1 guard
        var = (ss - s * mean_shifted) * denom
        std = jnp.sqrt(jnp.maximum(var, 0.0))
        loc_ref[...] = -(mean_shifted + shift_ref[...])
        scale_ref[...] = 1.0 / (std + 1e-6)


# ----------------------------------------------------------------------------
# Kernel 2: affine apply (pure streaming elementwise)
#   works for both layouts: (c_tile, hw_tile) x with (c_tile, 1) params, or
#   (n_tile, lane_tile) x with (1, lane_tile) params (broadcasting handles it)
# ----------------------------------------------------------------------------
def _actnorm_apply_kernel(x_ref, loc_ref, scale_ref, out_ref):
    x = x_ref[...].astype(jnp.float32)
    out_ref[...] = (scale_ref[...] * (x + loc_ref[...])).astype(out_ref.dtype)


# ----------------------------------------------------------------------------
# Wrappers (NCHW in / NCHW out; no transposes, only free reshapes)
# ----------------------------------------------------------------------------
def actnorm_initialize(x_nchw):
    """Returns (loc, scale) with PyTorch shape (1, C, 1, 1)."""
    N, C, H, W = x_nchw.shape
    HW = H * W
    L = N * HW
    x_v = x_nchw.reshape(N, C, HW)                           # free view

    block_budget = _block_budget_bytes()
    # Budget with f32 itemsize: the block-wide f32 accumulators dominate.
    c_tile, hw_tile = _tiles_2d(C, HW, 4, block_budget)
    grid = (pl.cdiv(C, c_tile), N, pl.cdiv(HW, hw_tile))

    kernel = functools.partial(_actnorm_init_kernel,
                               total_count=L, hw=HW, hw_tile=hw_tile)

    loc_c, scale_c = pl.pallas_call(
        kernel,
        out_shape=(
            jax.ShapeDtypeStruct((C, 1), jnp.float32),
            jax.ShapeDtypeStruct((C, 1), jnp.float32),
        ),
        grid=grid,
        in_specs=[
            pl.BlockSpec((None, c_tile, hw_tile),
                         lambda ci, n, t: (n, ci, t)),
        ],
        out_specs=(
            pl.BlockSpec((c_tile, 1), lambda ci, n, t: (ci, 0)),
            pl.BlockSpec((c_tile, 1), lambda ci, n, t: (ci, 0)),
        ),
        scratch_shapes=[
            pltpu.VMEM((c_tile, hw_tile), jnp.float32),   # running sum
            pltpu.VMEM((c_tile, hw_tile), jnp.float32),   # running sum of sq
            pltpu.VMEM((c_tile, 1), jnp.float32),         # per-channel shift
        ],
        compiler_params=pltpu.CompilerParams(
            # Channel axis is embarrassingly parallel (uses v7x's 2nd core);
            # the (N, HW) reduction axes must stay sequential per channel.
            dimension_semantics=("parallel", "arbitrary", "arbitrary"),
            vmem_limit_bytes=_vmem_limit_bytes(),
        ),
    )(x_v)

    return loc_c.reshape(1, C, 1, 1), scale_c.reshape(1, C, 1, 1)


def actnorm_forward(x_nchw, loc, scale, logdet=True):
    """ActNorm forward.  x_nchw: (N,C,H,W); loc/scale: (1,C,1,1)."""
    N, C, H, W = x_nchw.shape
    HW = H * W
    block_budget = _block_budget_bytes()
    vmem_limit = _vmem_limit_bytes()
    itemsize = jnp.dtype(x_nchw.dtype).itemsize

    loc_c = loc.reshape(C, 1).astype(jnp.float32)
    scale_c = scale.reshape(C, 1).astype(jnp.float32)

    if HW >= 128:
        # (N, C, HW) view: lane-dense along HW, per-channel params broadcast
        # along the lane axis inside the kernel (no jnp.tile, no extra HBM op).
        x_v = x_nchw.reshape(N, C, HW)
        c_tile, hw_tile = _tiles_2d(C, HW, itemsize, block_budget)
        grid = (N, pl.cdiv(C, c_tile), pl.cdiv(HW, hw_tile))

        out_v = pl.pallas_call(
            _actnorm_apply_kernel,
            out_shape=jax.ShapeDtypeStruct((N, C, HW), x_nchw.dtype),
            grid=grid,
            in_specs=[
                pl.BlockSpec((None, c_tile, hw_tile),
                             lambda n, ci, hj: (n, ci, hj)),
                pl.BlockSpec((c_tile, 1), lambda n, ci, hj: (ci, 0)),
                pl.BlockSpec((c_tile, 1), lambda n, ci, hj: (ci, 0)),
            ],
            out_specs=pl.BlockSpec((None, c_tile, hw_tile),
                                   lambda n, ci, hj: (n, ci, hj)),
            compiler_params=pltpu.CompilerParams(
                dimension_semantics=("parallel", "parallel", "parallel"),
                vmem_limit_bytes=vmem_limit,
            ),
        )(x_v, loc_c, scale_c)
        out = out_v.reshape(N, C, H, W)
    else:
        # Small spatial (late, squeezed Glow levels): keep the output lane
        # dimension wide (C*HW) to avoid masked partial stores.  Params are
        # pre-expanded once to a single (1, C*HW) row (tiny XLA op).
        L2 = C * HW
        x_v = x_nchw.reshape(N, L2)
        loc_row = jnp.broadcast_to(loc_c, (C, HW)).reshape(1, L2)
        scale_row = jnp.broadcast_to(scale_c, (C, HW)).reshape(1, L2)
        n_tile, lane_tile = _tiles_2d(N, L2, itemsize, block_budget)
        grid = (pl.cdiv(N, n_tile), pl.cdiv(L2, lane_tile))

        out_v = pl.pallas_call(
            _actnorm_apply_kernel,
            out_shape=jax.ShapeDtypeStruct((N, L2), x_nchw.dtype),
            grid=grid,
            in_specs=[
                pl.BlockSpec((n_tile, lane_tile), lambda i, j: (i, j)),
                pl.BlockSpec((1, lane_tile), lambda i, j: (0, j)),
                pl.BlockSpec((1, lane_tile), lambda i, j: (0, j)),
            ],
            out_specs=pl.BlockSpec((n_tile, lane_tile), lambda i, j: (i, j)),
            compiler_params=pltpu.CompilerParams(
                dimension_semantics=("parallel", "parallel"),
                vmem_limit_bytes=vmem_limit,
            ),
        )(x_v, loc_row, scale_row)
        out = out_v.reshape(N, C, H, W)

    if logdet:
        # Tiny (C,) reduction — plain JAX, keeps the kernel pure streaming.
        ld = (H * W) * jnp.sum(jnp.log(jnp.abs(scale.astype(jnp.float32))))
        return out, ld
    return out


def actnorm_forward_with_init(x_nchw, loc, scale, initialized, logdet=True):
    """Mirrors PyTorch forward: runs data-dependent init if not initialized.

    `initialized` is a Python bool (static), matching the eager buffer check
    `self.initialized.item() == 0`.  Returns (forward output, (loc, scale))
    since JAX has no in-place parameter mutation.
    """
    # TODO(synk): the in-place `self.initialized.fill_(1)` buffer mutation has
    # no JAX equivalent; callers must thread the returned params/flag.
    if not initialized:
        loc, scale = actnorm_initialize(x_nchw)
    return actnorm_forward(x_nchw, loc, scale, logdet=logdet), (loc, scale)


# ----------------------------------------------------------------------------
# Reference (pure JAX, two-pass) for validation
# ----------------------------------------------------------------------------
def _reference(x_nchw):
    N, C, H, W = x_nchw.shape
    mean = jnp.mean(x_nchw, axis=(0, 2, 3)).reshape(1, C, 1, 1)
    std = jnp.std(x_nchw, axis=(0, 2, 3), ddof=1).reshape(1, C, 1, 1)
    loc = -mean
    scale = 1.0 / (std + 1e-6)
    out = scale * (x_nchw + loc)
    logdet = H * W * jnp.sum(jnp.log(jnp.abs(scale)))
    return out, logdet


if __name__ == "__main__":
    key = jax.random.PRNGKey(0)

    # --- Case 1: normal spatial size (HW >= 128 path) -----------------------
    N, C, H, W = 2, 4, 16, 16
    k1, k2 = jax.random.split(key)
    x = jax.random.normal(k1, (N, C, H, W), dtype=jnp.float32) * 1.7 + 0.3

    loc0 = jnp.zeros((1, C, 1, 1), jnp.float32)
    scale0 = jnp.ones((1, C, 1, 1), jnp.float32)

    (out, logdet_val), (loc, scale) = actnorm_forward_with_init(
        x, loc0, scale0, initialized=False, logdet=True
    )
    out = jax.block_until_ready(out)
    logdet_val = jax.block_until_ready(logdet_val)

    out_ref, logdet_ref = _reference(x)
    assert out.shape == (N, C, H, W)
    assert jnp.allclose(out, out_ref, atol=1e-4, rtol=1e-4), (
        float(jnp.max(jnp.abs(out - out_ref)))
    )
    assert jnp.allclose(logdet_val, logdet_ref, atol=1e-2, rtol=1e-4), (
        float(logdet_val), float(logdet_ref)
    )

    # Second forward (already initialized) reuses the same params.
    out2, logdet2 = actnorm_forward(x, loc, scale, logdet=True)
    out2 = jax.block_until_ready(out2)
    assert jnp.allclose(out2, out_ref, atol=1e-4, rtol=1e-4)

    # --- Case 2: small spatial size (HW < 128 lane-dense path) --------------
    N2, C2, H2, W2 = 2, 8, 4, 4
    x_s = jax.random.normal(k2, (N2, C2, H2, W2), dtype=jnp.float32) * 0.9 - 0.4
    (out_s, logdet_s), (loc_s, scale_s) = actnorm_forward_with_init(
        x_s, jnp.zeros((1, C2, 1, 1), jnp.float32),
        jnp.ones((1, C2, 1, 1), jnp.float32),
        initialized=False, logdet=True,
    )
    out_s = jax.block_until_ready(out_s)
    logdet_s = jax.block_until_ready(logdet_s)
    out_s_ref, logdet_s_ref = _reference(x_s)
    assert jnp.allclose(out_s, out_s_ref, atol=1e-4, rtol=1e-4), (
        float(jnp.max(jnp.abs(out_s - out_s_ref)))
    )
    assert jnp.allclose(logdet_s, logdet_s_ref, atol=1e-2, rtol=1e-4), (
        float(logdet_s), float(logdet_s_ref)
    )

    print("KERNEL_OK")
</pallas_src>

<mosaic_0001>
module attributes {stable_mosaic.version = 11 : i64} {
  func.func @_actnorm_init_kernel(%arg0: i32, %arg1: i32, %arg2: i32, %arg3: memref<1x4x256xf32, #tpu.memory_space<vmem>>, %arg4: memref<4x1xf32, #tpu.memory_space<vmem>>, %arg5: memref<4x1xf32, #tpu.memory_space<vmem>>, %arg6: memref<4x256xf32, #tpu.memory_space<vmem>>, %arg7: memref<4x256xf32, #tpu.memory_space<vmem>>, %arg8: memref<4x1xf32, #tpu.memory_space<vmem>>) attributes {dimension_semantics = [#tpu.dimension_semantics<parallel>, #tpu.dimension_semantics<arbitrary>, #tpu.dimension_semantics<arbitrary>], iteration_bounds = array<i64: 1, 2, 1>, scalar_prefetch = 0 : i64, scratch_operands = 3 : i64, tpu.core_type = #tpu.core_type<tc>, window_params = [{transform_indices = @transform_0, window_bounds = array<i64: 1, 4, 256>}, {transform_indices = @transform_1, window_bounds = array<i64: 4, 1>}, {transform_indices = @transform_2, window_bounds = array<i64: 4, 1>}]} {
    %c0_i32 = arith.constant 0 : i32
    %0 = arith.cmpi eq, %arg1, %c0_i32 : i32
    %c0_i32_0 = arith.constant 0 : i32
    %1 = arith.cmpi eq, %arg2, %c0_i32_0 : i32
    %2 = arith.andi %0, %1 : i1
    %c1_i32 = arith.constant 1 : i32
    %3 = arith.cmpi eq, %arg1, %c1_i32 : i32
    %c0_i32_1 = arith.constant 0 : i32
    %4 = arith.cmpi eq, %arg2, %c0_i32_1 : i32
    %5 = arith.andi %3, %4 : i1
    %c0 = arith.constant 0 : index
    %c0_2 = arith.constant 0 : index
    %c0_3 = arith.constant 0 : index
    %6 = vector.load %arg3[%c0, %c0_2, %c0_3] : memref<1x4x256xf32, #tpu.memory_space<vmem>>, vector<1x4x256xf32>
    %7 = vector.shape_cast %6 : vector<1x4x256xf32> to vector<4x256xf32>
    %8 = arith.extui %2 : i1 to i32
    %c0_i32_4 = arith.constant 0 : i32
    %9 = arith.cmpi ne, %8, %c0_i32_4 : i32
    scf.if %9 {
      %cst_17 = arith.constant 0.000000e+00 : f32
      %30 = vector.broadcast %cst_17 : f32 to vector<4x256xf32>
      %c0_18 = arith.constant 0 : index
      %c0_19 = arith.constant 0 : index
      %31 = vector.load %arg6[%c0_18, %c0_19] : memref<4x256xf32, #tpu.memory_space<vmem>>, vector<4x256xf32>
      tpu.vector_store %arg6[%c0_18, %c0_19], %30 {strides = array<i32>} : memref<4x256xf32, #tpu.memory_space<vmem>>, vector<4x256xf32>,
      %cst_20 = arith.constant 0.000000e+00 : f32
      %32 = vector.broadcast %cst_20 : f32 to vector<4x256xf32>
      %c0_21 = arith.constant 0 : index
      %c0_22 = arith.constant 0 : index
      %33 = vector.load %arg7[%c0_21, %c0_22] : memref<4x256xf32, #tpu.memory_space<vmem>>, vector<4x256xf32>
      tpu.vector_store %arg7[%c0_21, %c0_22], %32 {strides = array<i32>} : memref<4x256xf32, #tpu.memory_space<vmem>>, vector<4x256xf32>,
      %34 = vector.extract_strided_slice %7 {offsets = [0, 0], sizes = [4, 1], strides = [1, 1]} : vector<4x256xf32> to vector<4x1xf32>
      %c0_23 = arith.constant 0 : index
      %c0_24 = arith.constant 0 : index
      %35 = vector.load %arg8[%c0_23, %c0_24] : memref<4x1xf32, #tpu.memory_space<vmem>>, vector<4x1xf32>
      tpu.vector_store %arg8[%c0_23, %c0_24], %34 {strides = array<i32>} : memref<4x1xf32, #tpu.memory_space<vmem>>, vector<4x1xf32>,
    } else {
    }
    %10 = tpu.iota {dimensions = array<i32: 1>} : vector<4x256xi32>
    %c256_i32 = arith.constant 256 : i32
    %11 = arith.muli %arg2, %c256_i32 : i32
    %12 = vector.broadcast %11 : i32 to vector<4x256xi32>
    %13 = arith.addi %12, %10 : vector<4x256xi32>
    %c256_i32_5 = arith.constant 256 : i32
    %14 = vector.broadcast %c256_i32_5 : i32 to vector<4x256xi32>
    %15 = arith.cmpi slt, %13, %14 : vector<4x256xi32>
    %c0_6 = arith.constant 0 : index
    %c0_7 = arith.constant 0 : index
    %16 = vector.load %arg8[%c0_6, %c0_7] : memref<4x1xf32, #tpu.memory_space<vmem>>, vector<4x1xf32>
    %17 = vector.broadcast %16 : vector<4x1xf32> to vector<4x256xf32>
    %18 = arith.subf %7, %17 : vector<4x256xf32>
    %cst = arith.constant 0.000000e+00 : f32
    %19 = vector.broadcast %cst : f32 to vector<4x256xf32>
    %20 = arith.select %15, %18, %19 : vector<4x256xi1>, vector<4x256xf32>
    %c0_8 = arith.constant 0 : index
    %c0_9 = arith.constant 0 : index
    %21 = vector.load %arg6[%c0_8, %c0_9] : memref<4x256xf32, #tpu.memory_space<vmem>>, vector<4x256xf32>
    %22 = arith.addf %21, %20 : vector<4x256xf32>
    %c0_10 = arith.constant 0 : index
    %c0_11 = arith.constant 0 : index
    %23 = vector.load %arg6[%c0_10, %c0_11] : memref<4x256xf32, #tpu.memory_space<vmem>>, vector<4x256xf32>
    tpu.vector_store %arg6[%c0_10, %c0_11], %22 {strides = array<i32>} : memref<4x256xf32, #tpu.memory_space<vmem>>, vector<4x256xf32>,
    %c0_12 = arith.constant 0 : index
    %c0_13 = arith.constant 0 : index
    %24 = vector.load %arg7[%c0_12, %c0_13] : memref<4x256xf32, #tpu.memory_space<vmem>>, vector<4x256xf32>
    %25 = arith.mulf %20, %20 : vector<4x256xf32>
    %26 = arith.addf %24, %25 : vector<4x256xf32>
    %c0_14 = arith.constant 0 : index
    %c0_15 = arith.constant 0 : index
    %27 = vector.load %arg7[%c0_14, %c0_15] : memref<4x256xf32, #tpu.memory_space<vmem>>, vector<4x256xf32>
    tpu.vector_store %arg7[%c0_14, %c0_15], %26 {strides = array<i32>} : memref<4x256xf32, #tpu.memory_space<vmem>>, vector<4x256xf32>,
    %28 = arith.extui %5 : i1 to i32
    %c0_i32_16 = arith.constant 0 : i32
    %29 = arith.cmpi ne, %28, %c0_i32_16 : i32
    scf.if %29 {
      %c0_17 = arith.constant 0 : index
      %c0_18 = arith.constant 0 : index
      %30 = vector.load %arg6[%c0_17, %c0_18] : memref<4x256xf32, #tpu.memory_space<vmem>>, vector<4x256xf32>
      %cst_19 = arith.constant dense<0.000000e+00> : vector<4xf32>
      %31 = vector.multi_reduction <add>, %30, %cst_19 [1] : vector<4x256xf32> to vector<4xf32>
      %32 = vector.shape_cast %31 : vector<4xf32> to vector<4x1xf32>
      %c0_20 = arith.constant 0 : index
      %c0_21 = arith.constant 0 : index
      %33 = vector.load %arg7[%c0_20, %c0_21] : memref<4x256xf32, #tpu.memory_space<vmem>>, vector<4x256xf32>
      %cst_22 = arith.constant dense<0.000000e+00> : vector<4xf32>
      %34 = vector.multi_reduction <add>, %33, %cst_22 [1] : vector<4x256xf32> to vector<4xf32>
      %35 = vector.shape_cast %34 : vector<4xf32> to vector<4x1xf32>
      %cst_23 = arith.constant 0.001953125 : f32
      %36 = vector.broadcast %cst_23 : f32 to vector<4x1xf32>
      %37 = arith.mulf %32, %36 : vector<4x1xf32>
      %38 = arith.mulf %32, %37 : vector<4x1xf32>
      %39 = arith.subf %35, %38 : vector<4x1xf32>
      %cst_24 = arith.constant 0.00195694715 : f32
      %40 = vector.broadcast %cst_24 : f32 to vector<4x1xf32>
      %41 = arith.mulf %39, %40 : vector<4x1xf32>
      %cst_25 = arith.constant 0.000000e+00 : f32
      %42 = vector.broadcast %cst_25 : f32 to vector<4x1xf32>
      %43 = arith.maximumf %41, %42 : vector<4x1xf32>
      %44 = math.sqrt %43 : vector<4x1xf32>
      %c0_26 = arith.constant 0 : index
      %c0_27 = arith.constant 0 : index
      %45 = vector.load %arg8[%c0_26, %c0_27] : memref<4x1xf32, #tpu.memory_space<vmem>>, vector<4x1xf32>
      %46 = arith.addf %37, %45 : vector<4x1xf32>
      %cst_28 = arith.constant 0.000000e+00 : f32
      %47 = vector.broadcast %cst_28 : f32 to vector<4x1xf32>
      %48 = arith.subf %47, %46 : vector<4x1xf32>
      %c0_29 = arith.constant 0 : index
      %c0_30 = arith.constant 0 : index
      %49 = vector.load %arg4[%c0_29, %c0_30] : memref<4x1xf32, #tpu.memory_space<vmem>>, vector<4x1xf32>
      tpu.vector_store %arg4[%c0_29, %c0_30], %48 {strides = array<i32>} : memref<4x1xf32, #tpu.memory_space<vmem>>, vector<4x1xf32>,
      %cst_31 = arith.constant 9.99999997E-7 : f32
      %50 = vector.broadcast %cst_31 : f32 to vector<4x1xf32>
      %51 = arith.addf %44, %50 : vector<4x1xf32>
      %cst_32 = arith.constant 1.000000e+00 : f32
      %52 = vector.broadcast %cst_32 : f32 to vector<4x1xf32>
      %53 = arith.divf %52, %51 : vector<4x1xf32>
      %c0_33 = arith.constant 0 : index
      %c0_34 = arith.constant 0 : index
      %54 = vector.load %arg5[%c0_33, %c0_34] : memref<4x1xf32, #tpu.memory_space<vmem>>, vector<4x1xf32>
      tpu.vector_store %arg5[%c0_33, %c0_34], %53 {strides = array<i32>} : memref<4x1xf32, #tpu.memory_space<vmem>>, vector<4x1xf32>,
    } else {
    }
    return
  }
  func.func @transform_0(%arg0: i32, %arg1: i32, %arg2: i32) -> (i32, i32, i32) {
    %c0_i32 = arith.constant 0 : i32
    return %arg1, %arg0, %arg2 : i32, i32, i32
  }
  func.func @transform_1(%arg0: i32, %arg1: i32, %arg2: i32) -> (i32, i32) {
    %c0_i32 = arith.constant 0 : i32
    %c0_i32_0 = arith.constant 0 : i32
    return %arg0, %c0_i32 : i32, i32
  }
  func.func @transform_2(%arg0: i32, %arg1: i32, %arg2: i32) -> (i32, i32) {
    %c0_i32 = arith.constant 0 : i32
    %c0_i32_0 = arith.constant 0 : i32
    return %arg0, %c0_i32 : i32, i32
  }
}

</mosaic_0001>

<llo_original>
// kernel: tpu_custom_call.1
$region0: #{tpu_custom_call.1}
  #allocation0 [shape = 'u32[]', space=smem, size = 0x4, offset = 0x4, fixed_abs, tag = 'smem constant byte address 0x4 - core index']
  #allocation1 [shape = 'u32[144,128]{1,0:T(1,128)}', space=vmem, size = 0x12000, scoped, tag = 'internal scratch']
  #allocation2 [shape = 'f32[4,256]{1,0:T(4,128)}', space=vmem, size = 0x1000, scoped, tag = 'scratch operand']
  #allocation3 [shape = 'f32[4,256]{1,0:T(4,128)}', space=vmem, size = 0x1000, scoped, tag = 'scratch operand']
  #allocation4 [shape = 'f32[4,1]{1,0:T(4,128)}', space=vmem, size = 0x800, scoped, tag = 'scratch operand']
  %s0 = inlined_call_operand.hbm [shape: f32[2,4,256], index: 0, kind: input, shape index: {}]
  %s1 = inlined_call_operand.hbm [shape: f32[4,1], index: 1, kind: output, shape index: {0}]
  %s2 = inlined_call_operand.hbm [shape: f32[4,1], index: 2, kind: output, shape index: {1}]
  %3 = xla_tuple %s1, %s2
  %s4 = sld [smem:[#allocation0]]
  $region57: #{tpu_custom_call.1} parent=0
    _
  %s6 = ssub.s32 1, %s4
  %s7 = scalar_select 0, %s6, %s4
  $region1: #{tpu_custom_call.1} parent=0
    #allocation5 [shape = 'u8[8192]{0}', space=vmem, size = 0x2000, scoped, tag = 'input window, operand 0']
    #allocation6 [shape = 's32[2]{0}', space=sflag, size = 0x8, scoped, tag = 'scoped memory for tpu_custom_call.1']
    #allocation7 [shape = 's32[2]{0}', space=sflag, size = 0x8, scoped, tag = 'scoped memory for tpu_custom_call.1']
    #allocation8 [shape = 'u8[2048]{0}', space=vmem, size = 0x800, scoped, tag = 'output window, operand 0, single buffered']
    #allocation9 [shape = 'u8[2048]{0}', space=vmem, size = 0x800, scoped, tag = 'output window, operand 1, single buffered']
    #allocation10 [shape = 's32[1]{0}', space=sflag, size = 0x4, scoped, tag = 'scoped memory for tpu_custom_call.1']
    %8 = vsyncpa [#allocation6], 0
    %s9 = scalar_lea.sflag [#allocation6], 1
    %10 = vsyncpa %s9, 0
    %11 = vsyncpa [#allocation7], 0
    %12 = vsyncpa [#allocation10], 0
    loop: start=0, step=1, limit=4
    $region2: #{tpu_custom_call.1} parent=1 // loop_pre_header
      _
    $region3: #{tpu_custom_call.1} parent=1 // loop_header
      %s14 = sphi 0, %s18
      %p15 = scmp.ge.s32.totalorder %s14, 4
      %s21 = sphi 0, %s40
      %s22 = sphi 0, %s36
      %s23 = sphi 0, %s32
      %s24 = sphi 0, %s21
      %s25 = sphi 0, %s22
      %s26 = sphi 0, %s23
      %s27 = sphi 0, %s24
      %s28 = sphi 0, %s25
      %s29 = sphi 0, %s26
      %s47 = sphi 0, %s49
      %s50 = sphi 0, %s47
      %s51 = sphi 0, %s50
      %s67 = sphi 0, %s51
      %s73 = sphi 0, %s75
      %s76 = sphi 0, %s73
      %s77 = sphi 0, %s76
      %s93 = sphi 0, %s77
      %s99 = sphi 0, %s101
      %s102 = sphi 0, %s99
      %s103 = sphi 0, %s102
      %s119 = sphi 0, %s103
    $region4: #{tpu_custom_call.1} parent=1 // loop_header_branch
      %17 = sbr.rel (%p15) target = $region8
    $region5: #{tpu_custom_call.1} parent=1 // loop_body
      %s19 = ssub.s32 %s14, 1
      %s20 = ssub.s32 %s14, 2
      %s30 = sadd.s32 1, %s23
      %p31 = scmp.ge.s32.totalorder %s30, 1
      %s32 = scalar_select %p31, 0, %s30
      %s33 = sadd.s32 1, %s22
      %s34 = scalar_select %p31, %s33, %s22
      %p35 = scmp.ge.s32.totalorder %s34, 2
      %s36 = scalar_select %p35, 0, %s34
      %s37 = sadd.s32 1, %s21
      %s38 = scalar_select %p35, %s37, %s21
      %p39 = scmp.ge.s32.totalorder %s38, 1
      %s40 = scalar_select %p39, 0, %s38
      %s41 = ssub.s32 %s22, %s36
      %s42 = ssub.s32 %s21, %s40
      %s43 = sor.u32 %s41, %s42
      %s44 = ssub.s32 %s23, %s32
      %s45 = sor.u32 %s43, %s44
      %p46 = scmp.eq.s32.totalorder %s45, 0
      %s48 = sadd.s32 %s47, 1
      %s49 = scalar_select %p46, %s47, %s48
      %p52 = pneg %p46
      %p53 = scmp.eq.s32.totalorder %s14, 1
      %p54 = por %p52, %p53
      %p55 = scmp.ne.s32.totalorder %s47, %s50
      %p56 = scmp.eq.s32.totalorder %s14, 0
      %p57 = por %p55, %p56
      %p58 = scmp.ne.s32.totalorder %s47, %s50
      %p59 = scmp.eq.s32.totalorder %s19, 1
      %p60 = por %p58, %p59
      %p61 = scmp.ne.s32.totalorder %s50, %s51
      %p62 = scmp.eq.s32.totalorder %s19, 0
      %p63 = por %p61, %p62
      %p64 = scmp.ne.s32.totalorder %s50, %s51
      %p65 = scmp.eq.s32.totalorder %s20, 1
      %p66 = por %p64, %p65
      %p68 = scmp.ne.s32.totalorder %s51, %s67
      %p69 = scmp.eq.s32.totalorder %s20, 0
      %p70 = por %p68, %p69
      %s71 = ssub.s32 %s21, %s40
      %p72 = scmp.eq.s32.totalorder %s71, 0
      %s74 = sadd.s32 %s73, 1
      %s75 = scalar_select %p72, %s73, %s74
      %p78 = pneg %p72
      %p79 = scmp.eq.s32.totalorder %s14, 1
      %p80 = por %p78, %p79
      %p81 = scmp.ne.s32.totalorder %s73, %s76
      %p82 = scmp.eq.s32.totalorder %s14, 0
      %p83 = por %p81, %p82
      %p84 = scmp.ne.s32.totalorder %s73, %s76
      %p85 = scmp.eq.s32.totalorder %s19, 1
      %p86 = por %p84, %p85
      %p87 = scmp.ne.s32.totalorder %s76, %s77
      %p88 = scmp.eq.s32.totalorder %s19, 0
      %p89 = por %p87, %p88
      %p90 = scmp.ne.s32.totalorder %s76, %s77
      %p91 = scmp.eq.s32.totalorder %s20, 1
      %p92 = por %p90, %p91
      %p94 = scmp.ne.s32.totalorder %s77, %s93
      %p95 = scmp.eq.s32.totalorder %s20, 0
      %p96 = por %p94, %p95
      %s97 = ssub.s32 %s21, %s40
      %p98 = scmp.eq.s32.totalorder %s97, 0
      %s100 = sadd.s32 %s99, 1
      %s101 = scalar_select %p98, %s99, %s100
      %p104 = pneg %p98
      %p105 = scmp.eq.s32.totalorder %s14, 1
      %p106 = por %p104, %p105
      %p107 = scmp.ne.s32.totalorder %s99, %s102
      %p108 = scmp.eq.s32.totalorder %s14, 0
      %p109 = por %p107, %p108
      %p110 = scmp.ne.s32.totalorder %s99, %s102
      %p111 = scmp.eq.s32.totalorder %s19, 1
      %p112 = por %p110, %p111
      %p113 = scmp.ne.s32.totalorder %s102, %s103
      %p114 = scmp.eq.s32.totalorder %s19, 0
      %p115 = por %p113, %p114
      %p116 = scmp.ne.s32.totalorder %s102, %s103
      %p117 = scmp.eq.s32.totalorder %s20, 1
      %p118 = por %p116, %p117
      %p120 = scmp.ne.s32.totalorder %s103, %s119
      %p121 = scmp.eq.s32.totalorder %s20, 0
      %p122 = por %p120, %p121
      %p123 = scmp.le.s32.totalorder 1, %s14
      %p124 = scmp.lt.s32.totalorder %s14, 3
      %p125 = pnand %p123, %p124
      %p126 = pneg %p125
      // Predicated region
      $region9: #{tpu_custom_call.1} parent=5 // pred_check
        _
      $region10: #{tpu_custom_call.1} parent=5 // pred_check_branch
        %128 = sbr.rel (%p125) target = $region12
      $region11: #{tpu_custom_call.1} parent=5 // pred_region
        %s129 = ssub.s32 %s14, 1
      $region12: #{tpu_custom_call.1} parent=5 // pred_fallthru
        _
      %p130 = scmp.lt.s32.totalorder %s14, 2
      // Predicated region
      $region13: #{tpu_custom_call.1} parent=5 // pred_check
        %p131 = pneg %p130
      $region14: #{tpu_custom_call.1} parent=5 // pred_check_branch
        %133 = sbr.rel (%p131) target = $region16
      $region15: #{tpu_custom_call.1} parent=5 // pred_region
        // Predicated region
        $region17: #{tpu_custom_call.1} parent=15 // pred_check
          %p134 = pneg %p57
        $region18: #{tpu_custom_call.1} parent=15 // pred_check_branch
          %136 = sbr.rel (%p134) target = $region20
        $region19: #{tpu_custom_call.1} parent=15 // pred_region
          %s137 = sand.u32 %s47, 1
          %s138 = scalar_lea.sflag [#allocation6], %s137
          %s139 = sand.u32 %s47, 1
          %s140 = smul.addr %s139, 8
          %s141 = scalar_lea.vmem [#allocation5], %s140
          %s142 = smul.u32 2, %s23
          %s144 = ssub.s32 128, 128
          %145 = vsyncadd %s138, %s144
          %s146 = smul.addr %s21, 2
          %s147 = sadd.s32 %s142, %s146
          %s148 = smul.addr %s22, 2
          %s149 = sadd.s32 %s147, %s148
          %s150 = smul.addr %s149, 64
          %s151 = scalar_lea.hbm %s0, %s150
          %s153 = sshll.u32 %s141, 4
          %s154 = int_to_ptr.vmem [resolvable:$true] %s153
          %156 = dma.hbm_to_vmem [thread:$0]  %s151, 128, %s154, %s138
        $region20: #{tpu_custom_call.1} parent=15 // pred_fallthru
          _
      $region16: #{tpu_custom_call.1} parent=5 // pred_fallthru
        _
      %p157 = scmp.le.s32.totalorder 1, %s14
      %p158 = scmp.lt.s32.totalorder %s14, 3
      %p159 = pnand %p157, %p158
      %p160 = pneg %p159
      // Predicated region
      $region21: #{tpu_custom_call.1} parent=5 // pred_check
        _
      $region22: #{tpu_custom_call.1} parent=5 // pred_check_branch
        %162 = sbr.rel (%p159) target = $region24
      $region23: #{tpu_custom_call.1} parent=5 // pred_region
        %s163 = ssub.s32 %s14, 1
        %s164 = sand.u32 %s50, 1
        %s165 = scalar_lea.sflag [#allocation6], %s164
        %s166 = sand.u32 %s50, 1
        %s167 = smul.addr %s166, 8
        %s168 = scalar_lea.vmem [#allocation5], %s167
        // Predicated region
        $region25: #{tpu_custom_call.1} parent=23 // pred_check
          %p169 = pneg %p63
        $region26: #{tpu_custom_call.1} parent=23 // pred_check_branch
          %171 = sbr.rel (%p169) target = $region28
        $region27: #{tpu_custom_call.1} parent=23 // pred_region
          %172 = dma.done %s165, 128
        $region28: #{tpu_custom_call.1} parent=23 // pred_fallthru
          _
        %s173 = sand.u32 %s50, 1
        %s174 = scalar_lea.sflag [#allocation6], %s173
        %s175 = sand.u32 %s50, 1
        %s176 = smul.addr %s175, 8
        %s177 = scalar_lea.vmem [#allocation5], %s176
        %p178 = pneg %p63
        %p179 = pneg %p60
        %p180 = pneg %p89
        %p181 = pneg %p86
        %p182 = pneg %p115
        %p183 = pneg %p112
        %s184 = smul.u32 2, %s26
        %p185 = scmp.eq.s32.totalorder %s25, 0
        %p186 = scmp.eq.s32.totalorder %s26, 0
        %p187 = pnand %p185, %p186
        %p188 = pneg %p187
        %p189 = scmp.eq.s32.totalorder %s25, 1
        %p190 = pnand %p189, %p186
        %p191 = pneg %p190
        %v192 = vld [vmem:[%s168] sm:$0xff]
        // Predicated region
        $region29: #{tpu_custom_call.1} parent=23 // pred_check
          _
        $region30: #{tpu_custom_call.1} parent=23 // pred_check_branch
          %194 = sbr.rel (%p187) target = $region32
        $region31: #{tpu_custom_call.1} parent=23 // pred_region
          %195 = vst [vmem:[#allocation2] sm:$0xff] 0.0
          %196 = vst [vmem:[#allocation3] sm:$0xff] 0.0
          %vm197 = vcmask 3072
          %198 = vst.msk [vmem:[#allocation4] sm:$0xf] %vm197, %v192
        $region32: #{tpu_custom_call.1} parent=23 // pred_fallthru
          _
        %v199 = vlaneseq
        %v200 = vand.u32 %v199, 127
        %v201 = vadd.s32 %v200, 128
        %s202 = smul.u32 %s26, 256
        %v203 = vstv %s202
        %v204 = vadd.s32 %v203, %v200
        %v205 = vadd.s32 %v203, %v201
        %vm206 = vcmp.lt.s32.totalorder %v204, 256
        %vm207 = vcmp.lt.s32.totalorder %v205, 256
        %v208 = vld [vmem:[#allocation4] sm:$0xf]
        %210 = vset.pattern.permute.xlu0 0
        %211 = vperm.xlu0 %210, %v208
        %v212 = vpop.permute.xlu0 %211
        %v214 = vunpack.c.l.s4 839922192
        %v215 = vunpack.c.0.s8 %v214
        %v216 = vlaneseq
        %v217 = vshrl.u32 %v216, 7
        %v218 = vsub.s32 %v215, %v217
        %v219 = vrot.slane %v212, %v218
        %v221 = vsub.f32 %v192, %v219
        %v223 = vcombine.high %v221, %v221
        %v225 = vsel %vm206, %v221, 0.0
        %v226 = vsel %vm207, %v223, 0.0
        %v227 = vld [vmem:[#allocation2] sm:$0xff]
        %v230 = vcombine.low %v225, %v226
        %v232 = vadd.f32 %v227, %v230
        %233 = vst [vmem:[#allocation2] sm:$0xff] %v232
        %v234 = vld [vmem:[#allocation3] sm:$0xff]
        %v235 = vmul.f32 %v225, %v225
        %v236 = vmul.f32 %v226, %v226
        %v239 = vcombine.low %v235, %v236
        %v241 = vadd.f32 %v234, %v239
        %242 = vst [vmem:[#allocation3] sm:$0xff] %v241
        // Predicated region
        $region33: #{tpu_custom_call.1} parent=23 // pred_check
          _
        $region34: #{tpu_custom_call.1} parent=23 // pred_check_branch
          %244 = sbr.rel (%p190) target = $region36
        $region35: #{tpu_custom_call.1} parent=23 // pred_region
          %v245 = vld [vmem:[#allocation2] sm:$0xff]
          %v247 = vcombine.high %v245, %v245
          %vm249 = vcmask 1043456
          %v250 = vsel %vm249, %v245, 0.0
          %v251 = vsel %vm249, %v247, 0.0
          %v252 = vadd.f32 %v250, %v251
          %253 = vadd.xlane.f32.xlu0 %v252
          %v254 = vpop.xlane.xlu0 %253
          %v255 = vld [vmem:[#allocation3] sm:$0xff]
          %v257 = vcombine.high %v255, %v255
          %v259 = vsel %vm249, %v255, 0.0
          %v260 = vsel %vm249, %v257, 0.0
          %v261 = vadd.f32 %v259, %v260
          %262 = vadd.xlane.f32.xlu0 %v261
          %v263 = vpop.xlane.xlu0 %262
          %v264 = vmul.f32 %v254, 0.001953125
          %v265 = vmul.f32 %v254, %v264
          %v266 = vsub.f32 %v263, %v265
          %v267 = vmul.f32 %v266, 0.0019569471
          %v268 = vmax.f32 %v267, 0.0
          %v269 = vrsqrt.pop %v268
          %v270 = vmul.f32 %v268, %v269
          %vm271 = vcmp.eq.f32.partialorder %v268, inf
          %v272 = vsel %vm271, %v268, %v270
          %vm273 = vcmp.eq.f32.partialorder %v268, 0.0
          %v274 = vand.u32 %v268, 2147483648
          %v275 = vsel %vm273, %v274, %v272
          %v276 = vld [vmem:[#allocation4] sm:$0xf]
          %v277 = vadd.f32 %v264, %v276
          %v278 = vsub.f32 0.0, %v277
          %vm279 = vcmask 3072
          %280 = vst.msk [vmem:[#allocation8] sm:$0xf] %vm279, %v278
          %v281 = vadd.f32 %v275, 1e-06
          %v282 = vrcp.pop %v281
          %v283 = vmul.f32 1.0, %v282
          %284 = vst.msk [vmem:[#allocation9] sm:$0xf] %vm279, %v283
        $region36: #{tpu_custom_call.1} parent=23 // pred_fallthru
          _
        // Predicated region
        $region37: #{tpu_custom_call.1} parent=23 // pred_check
          %p285 = pneg %p86
        $region38: #{tpu_custom_call.1} parent=23 // pred_check_branch
          %287 = sbr.rel (%p285) target = $region40
        $region39: #{tpu_custom_call.1} parent=23 // pred_region
          %s289 = ssub.s32 64, 64
          %290 = vsyncadd [#allocation7], %s289
          %s291 = smul.addr %s24, 64
          %s292 = scalar_lea.hbm %s1, %s291
          %s294 = sshll.u32 [#allocation8], 4
          %s295 = int_to_ptr.vmem [resolvable:$true] %s294
          %297 = dma.vmem_to_hbm [thread:$0]  %s295, 64, %s292, [#allocation7]
        $region40: #{tpu_custom_call.1} parent=23 // pred_fallthru
          _
        // Predicated region
        $region41: #{tpu_custom_call.1} parent=23 // pred_check
          %p298 = pneg %p112
        $region42: #{tpu_custom_call.1} parent=23 // pred_check_branch
          %300 = sbr.rel (%p298) target = $region44
        $region43: #{tpu_custom_call.1} parent=23 // pred_region
          %s302 = ssub.s32 64, 64
          %303 = vsyncadd [#allocation10], %s302
          %s304 = smul.addr %s24, 64
          %s305 = scalar_lea.hbm %s2, %s304
          %s307 = sshll.u32 [#allocation9], 4
          %s308 = int_to_ptr.vmem [resolvable:$true] %s307
          %310 = dma.vmem_to_hbm [thread:$0]  %s308, 64, %s305, [#allocation10]
        $region44: #{tpu_custom_call.1} parent=23 // pred_fallthru
          _
        // Predicated region
        $region45: #{tpu_custom_call.1} parent=23 // pred_check
          %p311 = pneg %p86
        $region46: #{tpu_custom_call.1} parent=23 // pred_check_branch
          %313 = sbr.rel (%p311) target = $region48
        $region47: #{tpu_custom_call.1} parent=23 // pred_region
          %314 = dma.done [#allocation7], 64
        $region48: #{tpu_custom_call.1} parent=23 // pred_fallthru
          _
        // Predicated region
        $region49: #{tpu_custom_call.1} parent=23 // pred_check
          %p315 = pneg %p112
        $region50: #{tpu_custom_call.1} parent=23 // pred_check_branch
          %317 = sbr.rel (%p315) target = $region52
        $region51: #{tpu_custom_call.1} parent=23 // pred_region
          %318 = dma.done [#allocation10], 64
        $region52: #{tpu_custom_call.1} parent=23 // pred_fallthru
          _
      $region24: #{tpu_custom_call.1} parent=5 // pred_fallthru
        _
      %p319 = scmp.le.s32.totalorder 2, %s14
      // Predicated region
      $region53: #{tpu_custom_call.1} parent=5 // pred_check
        %p320 = pneg %p319
      $region54: #{tpu_custom_call.1} parent=5 // pred_check_branch
        %322 = sbr.rel (%p320) target = $region56
      $region55: #{tpu_custom_call.1} parent=5 // pred_region
        %s323 = ssub.s32 %s14, 2
      $region56: #{tpu_custom_call.1} parent=5 // pred_fallthru
        _
    $region6: #{tpu_custom_call.1} parent=1 // loop_footer
      %s18 = sadd.s32 1, %s14
    $region7: #{tpu_custom_call.1} parent=1 // loop_footer_branch
      %13 = sbr.rel target = $region3
    $region8: #{tpu_custom_call.1} parent=1 // loop_exit
      _
    %324 = vsyncpa [#allocation6], 1
    %s325 = scalar_lea.sflag [#allocation6], 1
    %326 = vsyncpa %s325, 1
    %327 = vsyncpa [#allocation7], 1
    %s328 = scalar_lea.sflag [#allocation7], 1
    %329 = vsyncpa %s328, 1
    %330 = vsyncpa [#allocation10], 1

</llo_original>
